<compile_context>
chip_gen: v7x
topology: tpu7x:2x2x1
jax: 0.10.0
libtpu: 0.0.40
codegen_flags: <defaults>
</compile_context>

<pallas_src>
import functools
import math

import jax
import jax.numpy as jnp
from jax import lax
from jax.experimental import pallas as pl
from jax.experimental.pallas import tpu as pltpu


def _project_readout_kernel(x_ref, w1_ref, bias_ref, o_ref, *, start_index, tm):
    # x_ref   : (S, C)   full sequence for this batch element (input dtype)
    # w1_ref  : (C, C)   token half of the Linear weight, UN-transposed (out, in)
    # bias_ref: (1, C)   per-batch folded bias = cls @ W2^T + b   (f32)
    # o_ref   : (tm, C)  output tile
    n = pl.program_id(1)
    row0 = start_index + pl.multiple_of(n * tm, tm)
    tok = x_ref[pl.ds(row0, tm), :]                    # (tm, C)
    tok = tok.astype(w1_ref.dtype)                     # bf16 for the MXU

    # tok @ W1^T without a materialized transpose: contract tok dim 1 with
    # w1 dim 1 (weight layout is (out_features, in_features)).
    y = lax.dot_general(
        tok, w1_ref[...],
        dimension_numbers=(((1,), (1,)), ((), ())),
        preferred_element_type=jnp.float32)            # (tm, C) f32

    y = y + bias_ref[...]                              # broadcast (1, C) f32
    # Exact GELU (PyTorch nn.GELU default, approximate='none'):
    y = 0.5 * y * (1.0 + lax.erf(y * (1.0 / math.sqrt(2.0))))
    o_ref[...] = y.astype(o_ref.dtype)


def project_readout(x, weight, bias, start_index=1, *, tile_n=256,
                    matmul_dtype=jnp.bfloat16):
    """x: (B, S, C); weight: (C, 2C) [PyTorch Linear layout]; bias: (C,)."""
    B, S, C = x.shape
    N = S - start_index
    assert weight.shape == (C, 2 * C)
    assert bias.shape == (C,)

    # Token-axis tile. Use tile_n only if it divides N and respects the
    # (8, 128) sublane constraint; otherwise fall back to one tile per batch
    # element (always in-bounds, always correct).
    if tile_n is not None and tile_n % 8 == 0 and 0 < tile_n <= N and N % tile_n == 0:
        tm = tile_n
    else:
        tm = N
    nt = N // tm

    # Fold the readout (cls-token) projection into a per-batch bias (tiny, f32):
    #   bias_b = x[:, 0, :] @ W2^T + b,   W2 = weight[:, C:]
    cls = x[:, 0, :].astype(jnp.float32)
    bias_b = (jnp.einsum("bc,oc->bo", cls, weight[:, C:].astype(jnp.float32),
                         precision=lax.Precision.HIGHEST)
              + bias.astype(jnp.float32)).reshape(B, 1, C)

    # Token-half weight, un-transposed, cast to the MXU-friendly dtype
    # (slice + cast fuse into one small XLA op; no transpose written to HBM).
    w1 = weight[:, :C].astype(matmul_dtype)

    kernel = functools.partial(_project_readout_kernel,
                               start_index=start_index, tm=tm)

    # Rough VMEM budget: double-buffered x / w1 / out blocks + bias.
    vmem_need = (2 * S * C * x.dtype.itemsize
                 + 2 * C * C * w1.dtype.itemsize
                 + 2 * tm * C * x.dtype.itemsize
                 + 2 * C * 4)
    vmem_limit = int(min(max(2 * vmem_need, 8 * 1024 * 1024), 100 * 1024 * 1024))

    out = pl.pallas_call(
        kernel,
        out_shape=jax.ShapeDtypeStruct((B, N, C), x.dtype),
        grid_spec=pltpu.PrefetchScalarGridSpec(
            num_scalar_prefetch=0,
            grid=(B, nt),
            in_specs=[
                pl.BlockSpec((pl.Squeezed(), S, C), lambda b, n: (b, 0, 0)),
                pl.BlockSpec((C, C), lambda b, n: (0, 0)),
                pl.BlockSpec((pl.Squeezed(), 1, C), lambda b, n: (b, 0, 0)),
            ],
            out_specs=pl.BlockSpec((pl.Squeezed(), tm, C),
                                   lambda b, n: (b, n, 0)),
        ),
        compiler_params=pltpu.CompilerParams(
            dimension_semantics=("parallel", "parallel"),
            vmem_limit_bytes=vmem_limit),
    )(x, w1, bias_b)
    return out


def _reference(x, weight, bias, start_index=1):
    # Pure-JAX reference mirroring the PyTorch forward (all f32).
    readout = jnp.broadcast_to(x[:, 0:1, :], x[:, start_index:, :].shape)
    features = jnp.concatenate([x[:, start_index:, :], readout], axis=-1)
    y = jnp.einsum("bnf,of->bno", features, weight,
                   precision=lax.Precision.HIGHEST) + bias
    return 0.5 * y * (1.0 + lax.erf(y / jnp.sqrt(2.0)))


if __name__ == "__main__":
    key = jax.random.PRNGKey(0)
    kx, kw, kb = jax.random.split(key, 3)

    B, S, C = 2, 17, 128           # 1 readout token + 16 patch tokens
    start_index = 1

    x = jax.random.normal(kx, (B, S, C), dtype=jnp.float32)
    # Deterministic synthetic parameters for nn.Linear(2*C, C)
    weight = jax.random.normal(kw, (C, 2 * C), dtype=jnp.float32) * 0.05
    bias = jax.random.normal(kb, (C,), dtype=jnp.float32) * 0.05

    ref = _reference(x, weight, bias, start_index)

    # (1) Default fast path: bf16 MXU matmul, N tiled into 2 blocks -> grid (B, 2).
    out = project_readout(x, weight, bias, start_index, tile_n=8)
    out = jax.block_until_ready(out)
    assert out.shape == (B, S - start_index, C)
    assert jnp.allclose(out, ref, atol=2e-2, rtol=5e-2), "bf16 path mismatch"

    # (2) f32 path, single tile per batch element -> tight tolerance check.
    out32 = project_readout(x, weight, bias, start_index, tile_n=None,
                            matmul_dtype=jnp.float32)
    out32 = jax.block_until_ready(out32)
    assert jnp.allclose(out32, ref, atol=2e-5, rtol=2e-5), "f32 path mismatch"

    print("KERNEL_OK")
</pallas_src>

<mosaic_0001>
module attributes {stable_mosaic.version = 11 : i64} {
  func.func @_project_readout_kernel(%arg0: i32, %arg1: i32, %arg2: memref<1x17x128xf32, #tpu.memory_space<vmem>>, %arg3: memref<128x128xbf16, #tpu.memory_space<vmem>>, %arg4: memref<1x1x128xf32, #tpu.memory_space<vmem>>, %arg5: memref<1x8x128xf32, #tpu.memory_space<vmem>>) attributes {dimension_semantics = [#tpu.dimension_semantics<parallel>, #tpu.dimension_semantics<parallel>], iteration_bounds = array<i64: 2, 2>, scalar_prefetch = 0 : i64, scratch_operands = 0 : i64, tpu.core_type = #tpu.core_type<tc>, window_params = [{transform_indices = @transform_0, window_bounds = array<i64: 1, 17, 128>}, {pipeline_mode = #tpu.pipeline_mode<synchronous>, transform_indices = @transform_1, window_bounds = array<i64: 128, 128>}, {transform_indices = @transform_2, window_bounds = array<i64: 1, 1, 128>}, {transform_indices = @transform_3, window_bounds = array<i64: 1, 8, 128>}]} {
    %c8_i32 = arith.constant 8 : i32
    %0 = arith.muli %arg1, %c8_i32 : i32
    %1 = tpu.assume_multiple %0, 8 : i32
    %c1_i32 = arith.constant 1 : i32
    %2 = arith.addi %c1_i32, %1 : i32
    %c0 = arith.constant 0 : index
    %3 = arith.index_cast %2 : i32 to index
    %c0_0 = arith.constant 0 : index
    %4 = vector.load %arg2[%c0, %3, %c0_0] : memref<1x17x128xf32, #tpu.memory_space<vmem>>, vector<1x8x128xf32>
    %5 = vector.shape_cast %4 : vector<1x8x128xf32> to vector<8x128xf32>
    %6 = arith.truncf %5 : vector<8x128xf32> to vector<8x128xbf16>
    %c0_1 = arith.constant 0 : index
    %c0_2 = arith.constant 0 : index
    %7 = vector.load %arg3[%c0_1, %c0_2] : memref<128x128xbf16, #tpu.memory_space<vmem>>, vector<128x128xbf16>
    %cst = arith.constant dense<0.000000e+00> : vector<8x128xf32>
    %8 = tpu.matmul %6, %7, %cst {dimension_numbers = #tpu.dot_dimension_numbers<[1], [1], [0], [0], [0, 0, 1, 0], [], []>} : vector<8x128xbf16>, vector<128x128xbf16>, vector<8x128xf32> -> vector<8x128xf32>
    %c0_3 = arith.constant 0 : index
    %c0_4 = arith.constant 0 : index
    %c0_5 = arith.constant 0 : index
    %9 = vector.load %arg4[%c0_3, %c0_4, %c0_5] : memref<1x1x128xf32, #tpu.memory_space<vmem>>, vector<1x1x128xf32>
    %10 = vector.shape_cast %9 : vector<1x1x128xf32> to vector<1x128xf32>
    %11 = vector.broadcast %10 : vector<1x128xf32> to vector<8x128xf32>
    %12 = arith.addf %8, %11 : vector<8x128xf32>
    %cst_6 = arith.constant 5.000000e-01 : f32
    %13 = vector.broadcast %cst_6 : f32 to vector<8x128xf32>
    %14 = arith.mulf %13, %12 : vector<8x128xf32>
    %cst_7 = arith.constant 0.707106769 : f32
    %15 = vector.broadcast %cst_7 : f32 to vector<8x128xf32>
    %16 = arith.mulf %12, %15 : vector<8x128xf32>
    %17 = math.erf %16 : vector<8x128xf32>
    %cst_8 = arith.constant 1.000000e+00 : f32
    %18 = vector.broadcast %cst_8 : f32 to vector<8x128xf32>
    %19 = arith.addf %18, %17 : vector<8x128xf32>
    %20 = arith.mulf %14, %19 : vector<8x128xf32>
    %c0_9 = arith.constant 0 : index
    %c0_10 = arith.constant 0 : index
    %c0_11 = arith.constant 0 : index
    %21 = vector.load %arg5[%c0_9, %c0_10, %c0_11] : memref<1x8x128xf32, #tpu.memory_space<vmem>>, vector<1x8x128xf32>
    %22 = vector.shape_cast %21 : vector<1x8x128xf32> to vector<8x128xf32>
    %23 = vector.shape_cast %20 : vector<8x128xf32> to vector<1x8x128xf32>
    tpu.vector_store %arg5[%c0_9, %c0_10, %c0_11], %23 {strides = array<i32>} : memref<1x8x128xf32, #tpu.memory_space<vmem>>, vector<1x8x128xf32>,
    return
  }
  func.func @transform_0(%arg0: i32, %arg1: i32) -> (i32, i32, i32) {
    %c0_i32 = arith.constant 0 : i32
    %c0_i32_0 = arith.constant 0 : i32
    %c0_i32_1 = arith.constant 0 : i32
    return %arg0, %c0_i32, %c0_i32_0 : i32, i32, i32
  }
  func.func @transform_1(%arg0: i32, %arg1: i32) -> (i32, i32) {
    %c0_i32 = arith.constant 0 : i32
    %c0_i32_0 = arith.constant 0 : i32
    %c0_i32_1 = arith.constant 0 : i32
    return %c0_i32, %c0_i32_0 : i32, i32
  }
  func.func @transform_2(%arg0: i32, %arg1: i32) -> (i32, i32, i32) {
    %c0_i32 = arith.constant 0 : i32
    %c0_i32_0 = arith.constant 0 : i32
    %c0_i32_1 = arith.constant 0 : i32
    return %arg0, %c0_i32, %c0_i32_0 : i32, i32, i32
  }
  func.func @transform_3(%arg0: i32, %arg1: i32) -> (i32, i32, i32) {
    %c0_i32 = arith.constant 0 : i32
    %c0_i32_0 = arith.constant 0 : i32
    return %arg0, %arg1, %c0_i32 : i32, i32, i32
  }
}

</mosaic_0001>

<llo_original>
// kernel: tpu_custom_call.1
$region0: #{tpu_custom_call.1}
  #allocation0 [shape = 'u32[]', space=smem, size = 0x4, offset = 0x4, fixed_abs, tag = 'smem constant byte address 0x4 - core index']
  #allocation1 [shape = 'u32[144,128]{1,0:T(1,128)}', space=vmem, size = 0x12000, scoped, tag = 'internal scratch']
  %s0 = inlined_call_operand.vmem [shape: f32[2,17,128], index: 0, kind: input, shape index: {}]
  %s1 = inlined_call_operand.vmem [shape: bf16[128,128], index: 1, kind: input, shape index: {}]
  %s2 = inlined_call_operand.vmem [shape: f32[2,1,128], index: 2, kind: input, shape index: {}]
  %s3 = inlined_call_operand.hbm [shape: f32[2,16,128], index: 3, kind: output, shape index: {}]
  %s4 = sld [smem:[#allocation0]]
  $region45: #{tpu_custom_call.1} parent=0
    _
  %s6 = ssub.s32 1, %s4
  %s7 = scalar_select 0, %s6, %s4
  $region1: #{tpu_custom_call.1} parent=0
    #allocation2 [shape = 'u8[8192]{0}', space=vmem, size = 0x2000, scoped, tag = 'output window, operand 0']
    #allocation3 [shape = 's32[2]{0}', space=sflag, size = 0x8, scoped, tag = 'scoped memory for tpu_custom_call.1']
    %8 = vsyncpa [#allocation3], 0
    %s9 = scalar_lea.sflag [#allocation3], 1
    %10 = vsyncpa %s9, 0
    loop: start=0, step=1, limit=6
    $region2: #{tpu_custom_call.1} parent=1 // loop_pre_header
      _
    $region3: #{tpu_custom_call.1} parent=1 // loop_header
      %s12 = sphi 0, %s16
      %p13 = scmp.ge.s32.totalorder %s12, 6
      %s19 = sphi 0, %s31
      %s20 = sphi 0, %s27
      %s21 = sphi 0, %s19
      %s22 = sphi 0, %s20
      %s23 = sphi 0, %s21
      %s24 = sphi 0, %s22
      %s34 = sphi 0, %s36
      %s37 = sphi 0, %s34
      %s38 = sphi 0, %s37
      %s54 = sphi 0, %s38
      %s58 = sphi 0, %s58
      %s60 = sphi 0, %s58
      %s61 = sphi 0, %s60
      %s75 = sphi 0, %s61
      %s81 = sphi 0, %s83
      %s84 = sphi 0, %s81
      %s85 = sphi 0, %s84
      %s101 = sphi 0, %s85
      %s109 = sphi 0, %s111
      %s112 = sphi 0, %s109
      %s113 = sphi 0, %s112
      %s129 = sphi 0, %s113
    $region4: #{tpu_custom_call.1} parent=1 // loop_header_branch
      %15 = sbr.rel (%p13) target = $region8
    $region5: #{tpu_custom_call.1} parent=1 // loop_body
      %s17 = ssub.s32 %s12, 1
      %s18 = ssub.s32 %s12, 2
      %s25 = sadd.s32 1, %s20
      %p26 = scmp.ge.s32.totalorder %s25, 2
      %s27 = scalar_select %p26, 0, %s25
      %s28 = sadd.s32 1, %s19
      %s29 = scalar_select %p26, %s28, %s19
      %p30 = scmp.ge.s32.totalorder %s29, 2
      %s31 = scalar_select %p30, 0, %s29
      %s32 = ssub.s32 %s19, %s31
      %p33 = scmp.eq.s32.totalorder %s32, 0
      %s35 = sadd.s32 %s34, 1
      %s36 = scalar_select %p33, %s34, %s35
      %p39 = pneg %p33
      %p40 = scmp.eq.s32.totalorder %s12, 3
      %p41 = por %p39, %p40
      %p42 = scmp.ne.s32.totalorder %s34, %s37
      %p43 = scmp.eq.s32.totalorder %s12, 0
      %p44 = por %p42, %p43
      %p45 = scmp.ne.s32.totalorder %s34, %s37
      %p46 = scmp.eq.s32.totalorder %s17, 3
      %p47 = por %p45, %p46
      %p48 = scmp.ne.s32.totalorder %s37, %s38
      %p49 = scmp.eq.s32.totalorder %s17, 0
      %p50 = por %p48, %p49
      %p51 = scmp.ne.s32.totalorder %s37, %s38
      %p52 = scmp.eq.s32.totalorder %s18, 3
      %p53 = por %p51, %p52
      %p55 = scmp.ne.s32.totalorder %s38, %s54
      %p56 = scmp.eq.s32.totalorder %s18, 0
      %p57 = por %p55, %p56
      %s59 = sadd.s32 %s58, 1
      %p62 = scmp.eq.s32.totalorder %s12, 3
      %p63 = scmp.ne.s32.totalorder %s58, %s60
      %p64 = scmp.eq.s32.totalorder %s12, 0
      %p65 = por %p63, %p64
      %p66 = scmp.ne.s32.totalorder %s58, %s60
      %p67 = scmp.eq.s32.totalorder %s17, 3
      %p68 = por %p66, %p67
      %p69 = scmp.ne.s32.totalorder %s60, %s61
      %p70 = scmp.eq.s32.totalorder %s17, 0
      %p71 = por %p69, %p70
      %p72 = scmp.ne.s32.totalorder %s60, %s61
      %p73 = scmp.eq.s32.totalorder %s18, 3
      %p74 = por %p72, %p73
      %p76 = scmp.ne.s32.totalorder %s61, %s75
      %p77 = scmp.eq.s32.totalorder %s18, 0
      %p78 = por %p76, %p77
      %s79 = ssub.s32 %s19, %s31
      %p80 = scmp.eq.s32.totalorder %s79, 0
      %s82 = sadd.s32 %s81, 1
      %s83 = scalar_select %p80, %s81, %s82
      %p86 = pneg %p80
      %p87 = scmp.eq.s32.totalorder %s12, 3
      %p88 = por %p86, %p87
      %p89 = scmp.ne.s32.totalorder %s81, %s84
      %p90 = scmp.eq.s32.totalorder %s12, 0
      %p91 = por %p89, %p90
      %p92 = scmp.ne.s32.totalorder %s81, %s84
      %p93 = scmp.eq.s32.totalorder %s17, 3
      %p94 = por %p92, %p93
      %p95 = scmp.ne.s32.totalorder %s84, %s85
      %p96 = scmp.eq.s32.totalorder %s17, 0
      %p97 = por %p95, %p96
      %p98 = scmp.ne.s32.totalorder %s84, %s85
      %p99 = scmp.eq.s32.totalorder %s18, 3
      %p100 = por %p98, %p99
      %p102 = scmp.ne.s32.totalorder %s85, %s101
      %p103 = scmp.eq.s32.totalorder %s18, 0
      %p104 = por %p102, %p103
      %s105 = ssub.s32 %s19, %s31
      %s106 = ssub.s32 %s20, %s27
      %s107 = sor.u32 %s105, %s106
      %p108 = scmp.eq.s32.totalorder %s107, 0
      %s110 = sadd.s32 %s109, 1
      %s111 = scalar_select %p108, %s109, %s110
      %p114 = pneg %p108
      %p115 = scmp.eq.s32.totalorder %s12, 3
      %p116 = por %p114, %p115
      %p117 = scmp.ne.s32.totalorder %s109, %s112
      %p118 = scmp.eq.s32.totalorder %s12, 0
      %p119 = por %p117, %p118
      %p120 = scmp.ne.s32.totalorder %s109, %s112
      %p121 = scmp.eq.s32.totalorder %s17, 3
      %p122 = por %p120, %p121
      %p123 = scmp.ne.s32.totalorder %s112, %s113
      %p124 = scmp.eq.s32.totalorder %s17, 0
      %p125 = por %p123, %p124
      %p126 = scmp.ne.s32.totalorder %s112, %s113
      %p127 = scmp.eq.s32.totalorder %s18, 3
      %p128 = por %p126, %p127
      %p130 = scmp.ne.s32.totalorder %s113, %s129
      %p131 = scmp.eq.s32.totalorder %s18, 0
      %p132 = por %p130, %p131
      %p133 = scmp.le.s32.totalorder 1, %s12
      %p134 = scmp.lt.s32.totalorder %s12, 5
      %p135 = pnand %p133, %p134
      %p136 = pneg %p135
      // Predicated region
      $region9: #{tpu_custom_call.1} parent=5 // pred_check
        _
      $region10: #{tpu_custom_call.1} parent=5 // pred_check_branch
        %138 = sbr.rel (%p135) target = $region12
      $region11: #{tpu_custom_call.1} parent=5 // pred_region
        %s139 = ssub.s32 %s12, 1
        // Predicated region
        $region13: #{tpu_custom_call.1} parent=11 // pred_check
          %p140 = pneg %p71
        $region14: #{tpu_custom_call.1} parent=11 // pred_check_branch
          %142 = sbr.rel (%p140) target = $region16
        $region15: #{tpu_custom_call.1} parent=11 // pred_region
          _
        $region16: #{tpu_custom_call.1} parent=11 // pred_fallthru
          _
      $region12: #{tpu_custom_call.1} parent=5 // pred_fallthru
        _
      %p143 = scmp.lt.s32.totalorder %s12, 4
      // Predicated region
      $region17: #{tpu_custom_call.1} parent=5 // pred_check
        %p144 = pneg %p143
      $region18: #{tpu_custom_call.1} parent=5 // pred_check_branch
        %146 = sbr.rel (%p144) target = $region20
      $region19: #{tpu_custom_call.1} parent=5 // pred_region
        // Predicated region
        $region21: #{tpu_custom_call.1} parent=19 // pred_check
          %p147 = pneg %p44
        $region22: #{tpu_custom_call.1} parent=19 // pred_check_branch
          %149 = sbr.rel (%p147) target = $region24
        $region23: #{tpu_custom_call.1} parent=19 // pred_region
          %p150 = scmp.lt.s32.totalorder %s19, 1
          %s151 = scalar_select %p150, %s19, 1
          %s152 = smul.addr %s151, 3
          %s153 = smul.addr %s152, 8
          %s154 = scalar_lea.vmem %s0, %s153
        $region24: #{tpu_custom_call.1} parent=19 // pred_fallthru
          _
        // Predicated region
        $region25: #{tpu_custom_call.1} parent=19 // pred_check
          %p155 = pneg %p91
        $region26: #{tpu_custom_call.1} parent=19 // pred_check_branch
          %157 = sbr.rel (%p155) target = $region28
        $region27: #{tpu_custom_call.1} parent=19 // pred_region
          %p158 = scmp.lt.s32.totalorder %s19, 1
          %s159 = scalar_select %p158, %s19, 1
          %s160 = scalar_lea.vmem %s2, %s159
        $region28: #{tpu_custom_call.1} parent=19 // pred_fallthru
          _
      $region20: #{tpu_custom_call.1} parent=5 // pred_fallthru
        _
      %p161 = scmp.le.s32.totalorder 1, %s12
      %p162 = scmp.lt.s32.totalorder %s12, 5
      %p163 = pnand %p161, %p162
      %p164 = pneg %p163
      // Predicated region
      $region29: #{tpu_custom_call.1} parent=5 // pred_check
        _
      $region30: #{tpu_custom_call.1} parent=5 // pred_check_branch
        %166 = sbr.rel (%p163) target = $region32
      $region31: #{tpu_custom_call.1} parent=5 // pred_region
        %s167 = ssub.s32 %s12, 1
        %p168 = scmp.lt.s32.totalorder %s21, 1
        %s169 = scalar_select %p168, %s21, 1
        %s170 = smul.addr %s169, 3
        %s171 = smul.addr %s170, 8
        %s172 = scalar_lea.vmem %s0, %s171
        %p173 = pneg %p50
        %p174 = pneg %p47
        %p175 = pneg %p71
        %p176 = pneg %p68
        %p177 = scmp.lt.s32.totalorder %s21, 1
        %s178 = scalar_select %p177, %s21, 1
        %s179 = scalar_lea.vmem %s2, %s178
        %p180 = pneg %p97
        %p181 = pneg %p94
        %p182 = pneg %p125
        %p183 = pneg %p122
        %s184 = sand.u32 %s112, 1
        %s185 = scalar_lea.sflag [#allocation3], %s184
        %s186 = sand.u32 %s112, 1
        %s187 = smul.addr %s186, 8
        %s188 = scalar_lea.vmem [#allocation2], %s187
        %p189 = scmp.lt.s32.totalorder %s21, 1
        %s190 = scalar_select %p189, %s21, 1
        %s191 = smul.addr %s190, 3
        %s192 = smul.addr %s191, 8
        %s193 = scalar_lea.vmem %s0, %s192
        %p194 = scmp.lt.s32.totalorder %s21, 1
        %s195 = scalar_select %p194, %s21, 1
        %s196 = scalar_lea.vmem %s2, %s195
        %s198 = smul.u32 %s22, 8
        %s199 = sadd.s32 %s198, 1
        %s200 = scalar_lea.vmem %s193, %s199
        %v201 = vld [vmem:[%s200] sm:$0xff]
        %v202 = vpack.c.bf16 %v201, %v201
        %v203 = vld [vmem:[%s1] sm:$0xf]
        %v204 = vld [vmem:[%s1 + $0x4] sm:$0xf]
        %v205 = vld [vmem:[%s1 + $0x8] sm:$0xf]
        %v206 = vld [vmem:[%s1 + $0xc] sm:$0xf]
        %v207 = vld [vmem:[%s1 + $0x10] sm:$0xf]
        %v208 = vld [vmem:[%s1 + $0x14] sm:$0xf]
        %v209 = vld [vmem:[%s1 + $0x18] sm:$0xf]
        %v210 = vld [vmem:[%s1 + $0x1c] sm:$0xf]
        %v211 = vld [vmem:[%s1 + $0x20] sm:$0xf]
        %v212 = vld [vmem:[%s1 + $0x24] sm:$0xf]
        %v213 = vld [vmem:[%s1 + $0x28] sm:$0xf]
        %v214 = vld [vmem:[%s1 + $0x2c] sm:$0xf]
        %v215 = vld [vmem:[%s1 + $0x30] sm:$0xf]
        %v216 = vld [vmem:[%s1 + $0x34] sm:$0xf]
        %v217 = vld [vmem:[%s1 + $0x38] sm:$0xf]
        %v218 = vld [vmem:[%s1 + $0x3c] sm:$0xf]
        %v219 = vld [vmem:[%s196] sm:$0x1]
        %v221 = vlaneseq
        %v222 = vshrl.u32 %v221, 7
        %v223 = vsub.s32 0, %v222
        %v224 = vrot.slane %v219, %v223
        %v242 = vunpack.c.l.b16 %v203
        %v243 = vunpack.c.l.b16 %v204
        %v244 = vunpack.c.l.b16 %v205
        %v245 = vunpack.c.l.b16 %v206
        %v246 = vunpack.c.l.b16 %v207
        %v247 = vunpack.c.l.b16 %v208
        %v248 = vunpack.c.l.b16 %v209
        %v249 = vunpack.c.l.b16 %v210
        %v250 = vunpack.c.l.b16 %v211
        %v251 = vunpack.c.l.b16 %v212
        %v252 = vunpack.c.l.b16 %v213
        %v253 = vunpack.c.l.b16 %v214
        %v254 = vunpack.c.l.b16 %v215
        %v255 = vunpack.c.l.b16 %v216
        %v256 = vunpack.c.l.b16 %v217
        %v257 = vunpack.c.l.b16 %v218
        %v258 = vpack.c.b16 %v243, %v242
        %v259 = vpack.c.b16 %v245, %v244
        %v260 = vpack.c.b16 %v247, %v246
        %v261 = vpack.c.b16 %v249, %v248
        %v262 = vpack.c.b16 %v251, %v250
        %v263 = vpack.c.b16 %v253, %v252
        %v264 = vpack.c.b16 %v255, %v254
        %v265 = vpack.c.b16 %v257, %v256
        %274 = vmatprep.subr.bf16.mxu0 0
        %275 = vmatpush1.bf16.xpose.msra.mxu0 %v258
        %276 = vmatprep.subr.bf16.mxu0 0
        %277 = vmatpush1.bf16.xpose.msra.mxu0 %v259
        %278 = vmatprep.subr.bf16.mxu0 0
        %279 = vmatpush1.bf16.xpose.msra.mxu0 %v260
        %280 = vmatprep.subr.bf16.mxu0 0
        %281 = vmatpush1.bf16.xpose.msra.mxu0 %v261
        %282 = vmatprep.subr.bf16.mxu0 0
        %283 = vmatpush1.bf16.xpose.msra.mxu0 %v262
        %284 = vmatprep.subr.bf16.mxu0 0
        %285 = vmatpush1.bf16.xpose.msra.mxu0 %v263
        %286 = vmatprep.subr.bf16.mxu0 0
        %287 = vmatpush1.bf16.xpose.msra.mxu0 %v264
        %288 = vmatprep.subr.bf16.mxu0 0
        %289 = vmatpush1.bf16.xpose.msra.mxu0 %v265
        %290 = vmatprep.subr.bf16.mxu0 0
        %291 = vmatpush1.bf16.xpose.msra.mxu0 0
        %292 = vmatprep.subr.bf16.mxu0 0
        %293 = vmatpush1.bf16.xpose.msra.mxu0 0
        %294 = vmatprep.subr.bf16.mxu0 0
        %295 = vmatpush1.bf16.xpose.msra.mxu0 0
        %296 = vmatprep.subr.bf16.mxu0 0
        %297 = vmatpush1.bf16.xpose.msra.mxu0 0
        %298 = vmatprep.subr.bf16.mxu0 0
        %299 = vmatpush1.bf16.xpose.msra.mxu0 0
        %300 = vmatprep.subr.bf16.mxu0 0
        %301 = vmatpush1.bf16.xpose.msra.mxu0 0
        %302 = vmatprep.subr.bf16.mxu0 0
        %303 = vmatpush1.bf16.xpose.msra.mxu0 0
        %304 = vmatprep.subr.bf16.mxu0 0
        %305 = vmatpush1.bf16.xpose.msra.mxu0 0
        %306 = vmatprep.mubr.bf16.mxu0 0
        %307 = vmatmul.mubr.bf16.gmra.mrb[0].mxu0 %v202
        %v308 = vpop.f32.mrb[0].mxu0
        %v309 = vadd.f32 %v224, %v308
        %v310 = vpop.f32.mrb[0].mxu0
        %v311 = vpop.f32.mrb[0].mxu0
        %v312 = vpop.f32.mrb[0].mxu0
        %313 = vdwg.mxu0
        %v314 = vmul.f32 %v309, 0.5
        %v315 = vmul.f32 %v309, 0.70710677
        %v316 = verf.f32.pop %v315
        %v317 = vadd.f32 %v316, 1.0
        %v318 = vmul.f32 %v314, %v317
        %319 = vst [vmem:[%s188] sm:$0xff] %v318
        %s320 = sand.u32 %s112, 1
        %s321 = scalar_lea.sflag [#allocation3], %s320
        %s322 = sand.u32 %s112, 1
        %s323 = smul.addr %s322, 8
        %s324 = scalar_lea.vmem [#allocation2], %s323
        // Predicated region
        $region33: #{tpu_custom_call.1} parent=31 // pred_check
          %p325 = pneg %p122
        $region34: #{tpu_custom_call.1} parent=31 // pred_check_branch
          %327 = sbr.rel (%p325) target = $region36
        $region35: #{tpu_custom_call.1} parent=31 // pred_region
          %s329 = ssub.s32 128, 128
          %330 = vsyncadd %s321, %s329
          %s331 = smul.addr %s21, 2
          %s332 = sadd.s32 %s22, %s331
          %s333 = smul.addr %s332, 128
          %s334 = scalar_lea.hbm %s3, %s333
          %s336 = sshll.u32 %s324, 4
          %s337 = int_to_ptr.vmem [resolvable:$true] %s336
          %339 = dma.vmem_to_hbm [thread:$0]  %s337, 128, %s334, %s321
        $region36: #{tpu_custom_call.1} parent=31 // pred_fallthru
          _
      $region32: #{tpu_custom_call.1} parent=5 // pred_fallthru
        _
      %p340 = scmp.le.s32.totalorder 2, %s12
      // Predicated region
      $region37: #{tpu_custom_call.1} parent=5 // pred_check
        %p341 = pneg %p340
      $region38: #{tpu_custom_call.1} parent=5 // pred_check_branch
        %343 = sbr.rel (%p341) target = $region40
      $region39: #{tpu_custom_call.1} parent=5 // pred_region
        %s344 = ssub.s32 %s12, 2
        // Predicated region
        $region41: #{tpu_custom_call.1} parent=39 // pred_check
          %p345 = pneg %p128
        $region42: #{tpu_custom_call.1} parent=39 // pred_check_branch
          %347 = sbr.rel (%p345) target = $region44
        $region43: #{tpu_custom_call.1} parent=39 // pred_region
          %s348 = sand.u32 %s113, 1
          %s349 = scalar_lea.sflag [#allocation3], %s348
          %s350 = sand.u32 %s113, 1
          %s351 = smul.addr %s350, 8
          %s352 = scalar_lea.vmem [#allocation2], %s351
          %353 = dma.done %s349, 128
        $region44: #{tpu_custom_call.1} parent=39 // pred_fallthru
          _
      $region40: #{tpu_custom_call.1} parent=5 // pred_fallthru
        _
    $region6: #{tpu_custom_call.1} parent=1 // loop_footer
      %s16 = sadd.s32 1, %s12
    $region7: #{tpu_custom_call.1} parent=1 // loop_footer_branch
      %11 = sbr.rel target = $region3
    $region8: #{tpu_custom_call.1} parent=1 // loop_exit
      _
    %354 = vsyncpa [#allocation3], 1
    %s355 = scalar_lea.sflag [#allocation3], 1
    %356 = vsyncpa %s355, 1

</llo_original>
